<compile_context>
chip_gen: v6e
topology: v6e:2x2x1
jax: 0.10.0
libtpu: 0.0.40
codegen_flags: <defaults>
</compile_context>

<pallas_src>
import jax
import jax.numpy as jnp
from jax.experimental import pallas as pl
from jax.experimental.pallas import tpu as pltpu


def _round_up(x: int, m: int) -> int:
    return (x + m - 1) // m * m


def qnet_kernel(x_ref, w1_ref, b1_ref, w2_ref, b2_ref, w3_ref, b3_ref, o_ref):
    """One batch tile of the 3-layer MLP. MXU matmuls, f32 accumulation,
    bias-add / ReLU on the f32 accumulator, narrow (tb, action_dim) store."""
    x = x_ref[...]
    # Layer 1: Linear(state_dim, 64) + ReLU
    h1 = jnp.dot(x, w1_ref[...], preferred_element_type=jnp.float32)
    h1 = jnp.maximum(h1 + b1_ref[...], 0.0)
    # Layer 2: Linear(64, 64) + ReLU
    h2 = jnp.dot(h1.astype(w2_ref.dtype), w2_ref[...],
                 preferred_element_type=jnp.float32)
    h2 = jnp.maximum(h2 + b2_ref[...], 0.0)
    # Layer 3: Linear(64, action_dim), no activation.
    q = jnp.dot(h2.astype(w3_ref.dtype), w3_ref[...],
                preferred_element_type=jnp.float32)
    o_ref[...] = (q + b3_ref[...]).astype(o_ref.dtype)


def prepare_params(params, compute_dtype=jnp.bfloat16):
    """Cast weights to the MXU compute dtype ONCE (outside the per-step
    forward). Biases stay f32 so bias-add happens on the f32 accumulator."""
    p = dict(params)
    if compute_dtype is not None:
        for k in ("w1", "w2", "w3"):
            p[k] = params[k].astype(compute_dtype)
    return p


def qnetwork_forward(state, params, *, block_b=2048, out_dtype=jnp.float32):
    """state: (B, state_dim) float32.
    params: dict of (in, out) weights (f32 or bf16, already cast) and
            (1, out) f32 biases.
    out_dtype: f32 (default, safe for TD targets) or bf16 (halves the
               dominant output HBM write when only acting)."""
    B, state_dim = state.shape
    hidden = params["w1"].shape[1]
    action_dim = params["w3"].shape[1]

    compute_dtype = params["w1"].dtype
    x = state if state.dtype == compute_dtype else state.astype(compute_dtype)

    # Batch tile: multiple of 8 (sublane). No explicit padding of x or the
    # output: Pallas handles the ragged last block (masked output store), and
    # rows are strictly independent so garbage tail rows never leak.
    tb = _round_up(min(int(block_b), _round_up(B, 8)), 8)
    # v7x has 2 TensorCores: ensure the "parallel" batch grid has >= 2 steps
    # whenever there is enough work to split (no effect on 1-TC v5e/v6e).
    if B >= 16 and pl.cdiv(B, tb) < 2:
        tb = _round_up(pl.cdiv(B, 2), 8)
    grid = (pl.cdiv(B, tb),)

    weight_bytes = sum(int(v.size) * v.dtype.itemsize for v in params.values())
    cost = pl.CostEstimate(
        flops=2 * B * (state_dim * hidden + hidden * hidden + hidden * action_dim),
        transcendentals=0,
        bytes_accessed=(B * state_dim * jnp.dtype(compute_dtype).itemsize
                        + B * action_dim * jnp.dtype(out_dtype).itemsize
                        + weight_bytes),
    )

    return pl.pallas_call(
        qnet_kernel,
        out_shape=jax.ShapeDtypeStruct((B, action_dim), out_dtype),
        grid=grid,
        in_specs=[
            # x tile marches over the batch axis.
            pl.BlockSpec((tb, state_dim), lambda i: (i, 0)),
            # Weights / biases: constant index_map -> stay resident in VMEM.
            pl.BlockSpec((state_dim, hidden), lambda i: (0, 0)),
            pl.BlockSpec((1, hidden), lambda i: (0, 0)),
            pl.BlockSpec((hidden, hidden), lambda i: (0, 0)),
            pl.BlockSpec((1, hidden), lambda i: (0, 0)),
            pl.BlockSpec((hidden, action_dim), lambda i: (0, 0)),
            pl.BlockSpec((1, action_dim), lambda i: (0, 0)),
        ],
        # Narrow, unpadded output block: full-width last dim (action_dim).
        out_specs=pl.BlockSpec((tb, action_dim), lambda i: (i, 0)),
        compiler_params=pltpu.CompilerParams(
            dimension_semantics=("parallel",),  # shard batch grid across TCs on v7x
        ),
        cost_estimate=cost,
    )(x, params["w1"], params["b1"], params["w2"], params["b2"],
      params["w3"], params["b3"])


def init_params(key, state_dim, action_dim, hidden=64):
    """Mimics PyTorch nn.Linear default init: U(-1/sqrt(fan_in), +1/sqrt(fan_in))."""
    keys = jax.random.split(key, 6)

    def linear(kw, kb, fan_in, fan_out):
        bound = 1.0 / jnp.sqrt(fan_in)
        w = jax.random.uniform(kw, (fan_in, fan_out), jnp.float32, -bound, bound)
        b = jax.random.uniform(kb, (1, fan_out), jnp.float32, -bound, bound)
        return w, b

    w1, b1 = linear(keys[0], keys[1], state_dim, hidden)
    w2, b2 = linear(keys[2], keys[3], hidden, hidden)
    w3, b3 = linear(keys[4], keys[5], hidden, action_dim)
    return {"w1": w1, "b1": b1, "w2": w2, "b2": b2, "w3": w3, "b3": b3}


def qnetwork_reference(state, p):
    h1 = jnp.maximum(state @ p["w1"] + p["b1"], 0.0)
    h2 = jnp.maximum(h1 @ p["w2"] + p["b2"], 0.0)
    return h2 @ p["w3"] + p["b3"]


if __name__ == "__main__":
    key = jax.random.PRNGKey(0)
    k_params, k_state_small, k_state_big = jax.random.split(key, 3)

    state_dim, action_dim = 8, 4
    params_f32 = init_params(k_params, state_dim, action_dim)
    # Default bf16 MXU path: weights cast once here, biases stay f32.
    params_bf16 = prepare_params(params_f32, jnp.bfloat16)

    # 1) Small batch (B=2): single ragged grid step, narrow (B, 4) output.
    state_small = jax.random.normal(k_state_small, (2, state_dim), jnp.float32)
    q_small = jax.block_until_ready(qnetwork_forward(state_small, params_bf16))
    q_small_ref = qnetwork_reference(state_small, params_f32)
    assert q_small.shape == (2, action_dim)
    assert jnp.allclose(q_small, q_small_ref, atol=5e-2, rtol=5e-2), \
        "Pallas bf16 output mismatch vs reference (small batch)"

    # 2) Larger batch: multi-step pipelined grid with VMEM-resident weights.
    B = 2048
    state_big = jax.random.normal(k_state_big, (B, state_dim), jnp.float32)
    q_big = jax.block_until_ready(
        qnetwork_forward(state_big, params_bf16, block_b=512))
    q_big_ref = qnetwork_reference(state_big, params_f32)
    assert q_big.shape == (B, action_dim)
    assert jnp.allclose(q_big, q_big_ref, atol=5e-2, rtol=5e-2), \
        "Pallas bf16 output mismatch vs reference (tiled batch)"

    # 3) Full-f32 path (weights left in f32): exact vs reference.
    q_f32 = jax.block_until_ready(
        qnetwork_forward(state_big, params_f32, block_b=512))
    assert jnp.allclose(q_f32, q_big_ref, atol=1e-5, rtol=1e-5), \
        "Pallas f32 output mismatch vs reference"

    # 4) Batch not a multiple of the tile: exercises the masked ragged block.
    state_ragged = state_big[:1000]
    q_rag = jax.block_until_ready(
        qnetwork_forward(state_ragged, params_bf16, block_b=512))
    assert q_rag.shape == (1000, action_dim)
    assert jnp.allclose(q_rag, q_big_ref[:1000], atol=5e-2, rtol=5e-2), \
        "Pallas bf16 output mismatch vs reference (ragged batch)"

    print("KERNEL_OK")
</pallas_src>

<mosaic_0001>
module attributes {stable_mosaic.version = 11 : i64} {
  func.func @qnet_kernel(%arg0: i32, %arg1: memref<8x8xbf16, #tpu.memory_space<vmem>>, %arg2: memref<8x64xbf16, #tpu.memory_space<vmem>>, %arg3: memref<1x64xf32, #tpu.memory_space<vmem>>, %arg4: memref<64x64xbf16, #tpu.memory_space<vmem>>, %arg5: memref<1x64xf32, #tpu.memory_space<vmem>>, %arg6: memref<64x4xbf16, #tpu.memory_space<vmem>>, %arg7: memref<1x4xf32, #tpu.memory_space<vmem>>, %arg8: memref<8x4xf32, #tpu.memory_space<vmem>>) attributes {dimension_semantics = [#tpu.dimension_semantics<parallel>], iteration_bounds = array<i64: 1>, scalar_prefetch = 0 : i64, scratch_operands = 0 : i64, tpu.core_type = #tpu.core_type<tc>, window_params = [{transform_indices = @transform_0, window_bounds = array<i64: 8, 8>}, {pipeline_mode = #tpu.pipeline_mode<synchronous>, transform_indices = @transform_1, window_bounds = array<i64: 8, 64>}, {pipeline_mode = #tpu.pipeline_mode<synchronous>, transform_indices = @transform_2, window_bounds = array<i64: 1, 64>}, {pipeline_mode = #tpu.pipeline_mode<synchronous>, transform_indices = @transform_3, window_bounds = array<i64: 64, 64>}, {pipeline_mode = #tpu.pipeline_mode<synchronous>, transform_indices = @transform_4, window_bounds = array<i64: 1, 64>}, {pipeline_mode = #tpu.pipeline_mode<synchronous>, transform_indices = @transform_5, window_bounds = array<i64: 64, 4>}, {pipeline_mode = #tpu.pipeline_mode<synchronous>, transform_indices = @transform_6, window_bounds = array<i64: 1, 4>}, {transform_indices = @transform_7, window_bounds = array<i64: 8, 4>}]} {
    %c0 = arith.constant 0 : index
    %c0_0 = arith.constant 0 : index
    %0 = vector.load %arg1[%c0, %c0_0] : memref<8x8xbf16, #tpu.memory_space<vmem>>, vector<8x8xbf16>
    %c0_1 = arith.constant 0 : index
    %c0_2 = arith.constant 0 : index
    %1 = vector.load %arg2[%c0_1, %c0_2] : memref<8x64xbf16, #tpu.memory_space<vmem>>, vector<8x64xbf16>
    %cst = arith.constant dense<0.000000e+00> : vector<8x64xf32>
    %2 = tpu.matmul %0, %1, %cst {dimension_numbers = #tpu.dot_dimension_numbers<[1], [0], [0], [1], [0, 0, 1, 1], [], []>} : vector<8x8xbf16>, vector<8x64xbf16>, vector<8x64xf32> -> vector<8x64xf32>
    %c0_3 = arith.constant 0 : index
    %c0_4 = arith.constant 0 : index
    %3 = vector.load %arg3[%c0_3, %c0_4] : memref<1x64xf32, #tpu.memory_space<vmem>>, vector<1x64xf32>
    %4 = vector.broadcast %3 : vector<1x64xf32> to vector<8x64xf32>
    %5 = arith.addf %2, %4 : vector<8x64xf32>
    %cst_5 = arith.constant 0.000000e+00 : f32
    %6 = vector.broadcast %cst_5 : f32 to vector<8x64xf32>
    %7 = arith.maximumf %5, %6 : vector<8x64xf32>
    %8 = arith.truncf %7 : vector<8x64xf32> to vector<8x64xbf16>
    %c0_6 = arith.constant 0 : index
    %c0_7 = arith.constant 0 : index
    %9 = vector.load %arg4[%c0_6, %c0_7] : memref<64x64xbf16, #tpu.memory_space<vmem>>, vector<64x64xbf16>
    %cst_8 = arith.constant dense<0.000000e+00> : vector<8x64xf32>
    %10 = tpu.matmul %8, %9, %cst_8 {dimension_numbers = #tpu.dot_dimension_numbers<[1], [0], [0], [1], [0, 0, 1, 1], [], []>} : vector<8x64xbf16>, vector<64x64xbf16>, vector<8x64xf32> -> vector<8x64xf32>
    %c0_9 = arith.constant 0 : index
    %c0_10 = arith.constant 0 : index
    %11 = vector.load %arg5[%c0_9, %c0_10] : memref<1x64xf32, #tpu.memory_space<vmem>>, vector<1x64xf32>
    %12 = vector.broadcast %11 : vector<1x64xf32> to vector<8x64xf32>
    %13 = arith.addf %10, %12 : vector<8x64xf32>
    %cst_11 = arith.constant 0.000000e+00 : f32
    %14 = vector.broadcast %cst_11 : f32 to vector<8x64xf32>
    %15 = arith.maximumf %13, %14 : vector<8x64xf32>
    %16 = arith.truncf %15 : vector<8x64xf32> to vector<8x64xbf16>
    %c0_12 = arith.constant 0 : index
    %c0_13 = arith.constant 0 : index
    %17 = vector.load %arg6[%c0_12, %c0_13] : memref<64x4xbf16, #tpu.memory_space<vmem>>, vector<64x4xbf16>
    %cst_14 = arith.constant dense<0.000000e+00> : vector<8x4xf32>
    %18 = tpu.matmul %16, %17, %cst_14 {dimension_numbers = #tpu.dot_dimension_numbers<[1], [0], [0], [1], [0, 0, 1, 1], [], []>} : vector<8x64xbf16>, vector<64x4xbf16>, vector<8x4xf32> -> vector<8x4xf32>
    %c0_15 = arith.constant 0 : index
    %c0_16 = arith.constant 0 : index
    %19 = vector.load %arg7[%c0_15, %c0_16] : memref<1x4xf32, #tpu.memory_space<vmem>>, vector<1x4xf32>
    %20 = vector.broadcast %19 : vector<1x4xf32> to vector<8x4xf32>
    %21 = arith.addf %18, %20 : vector<8x4xf32>
    %c0_17 = arith.constant 0 : index
    %c0_18 = arith.constant 0 : index
    %22 = vector.load %arg8[%c0_17, %c0_18] : memref<8x4xf32, #tpu.memory_space<vmem>>, vector<8x4xf32>
    tpu.vector_store %arg8[%c0_17, %c0_18], %21 {strides = array<i32>} : memref<8x4xf32, #tpu.memory_space<vmem>>, vector<8x4xf32>,
    return
  }
  func.func @transform_0(%arg0: i32) -> (i32, i32) {
    %c0_i32 = arith.constant 0 : i32
    %c0_i32_0 = arith.constant 0 : i32
    return %arg0, %c0_i32 : i32, i32
  }
  func.func @transform_1(%arg0: i32) -> (i32, i32) {
    %c0_i32 = arith.constant 0 : i32
    %c0_i32_0 = arith.constant 0 : i32
    %c0_i32_1 = arith.constant 0 : i32
    return %c0_i32, %c0_i32_0 : i32, i32
  }
  func.func @transform_2(%arg0: i32) -> (i32, i32) {
    %c0_i32 = arith.constant 0 : i32
    %c0_i32_0 = arith.constant 0 : i32
    %c0_i32_1 = arith.constant 0 : i32
    return %c0_i32, %c0_i32_0 : i32, i32
  }
  func.func @transform_3(%arg0: i32) -> (i32, i32) {
    %c0_i32 = arith.constant 0 : i32
    %c0_i32_0 = arith.constant 0 : i32
    %c0_i32_1 = arith.constant 0 : i32
    return %c0_i32, %c0_i32_0 : i32, i32
  }
  func.func @transform_4(%arg0: i32) -> (i32, i32) {
    %c0_i32 = arith.constant 0 : i32
    %c0_i32_0 = arith.constant 0 : i32
    %c0_i32_1 = arith.constant 0 : i32
    return %c0_i32, %c0_i32_0 : i32, i32
  }
  func.func @transform_5(%arg0: i32) -> (i32, i32) {
    %c0_i32 = arith.constant 0 : i32
    %c0_i32_0 = arith.constant 0 : i32
    %c0_i32_1 = arith.constant 0 : i32
    return %c0_i32, %c0_i32_0 : i32, i32
  }
  func.func @transform_6(%arg0: i32) -> (i32, i32) {
    %c0_i32 = arith.constant 0 : i32
    %c0_i32_0 = arith.constant 0 : i32
    %c0_i32_1 = arith.constant 0 : i32
    return %c0_i32, %c0_i32_0 : i32, i32
  }
  func.func @transform_7(%arg0: i32) -> (i32, i32) {
    %c0_i32 = arith.constant 0 : i32
    %c0_i32_0 = arith.constant 0 : i32
    return %arg0, %c0_i32 : i32, i32
  }
}

</mosaic_0001>

<llo_original>
// kernel: tpu_custom_call.1
$region0: #{tpu_custom_call.1}
  #allocation0 [shape = 'u32[]', space=smem, size = 0x4, offset = 0x4, fixed_abs, tag = 'smem constant byte address 0x4 - core index']
  #allocation1 [shape = 'u32[144,128]{1,0:T(1,128)}', space=vmem, size = 0x12000, scoped, tag = 'internal scratch']
  %s0 = inlined_call_operand.vmem [shape: bf16[2,8], index: 0, kind: input, shape index: {}]
  %s1 = inlined_call_operand.vmem [shape: bf16[8,64], index: 1, kind: input, shape index: {}]
  %s2 = inlined_call_operand.vmem [shape: f32[1,64], index: 2, kind: input, shape index: {}]
  %s3 = inlined_call_operand.vmem [shape: bf16[64,64], index: 3, kind: input, shape index: {}]
  %s4 = inlined_call_operand.vmem [shape: f32[1,64], index: 4, kind: input, shape index: {}]
  %s5 = inlined_call_operand.vmem [shape: bf16[64,4], index: 5, kind: input, shape index: {}]
  %s6 = inlined_call_operand.vmem [shape: f32[1,4], index: 6, kind: input, shape index: {}]
  %s7 = inlined_call_operand.hbm [shape: f32[2,4], index: 7, kind: output, shape index: {}]
  %s8 = sld [smem:[#allocation0]]
  $region38: #{tpu_custom_call.1} parent=0
    _
  %s10 = ssub.s32 1, %s8
  %s11 = scalar_select 0, %s10, %s8
  $region1: #{tpu_custom_call.1} parent=0
    #allocation2 [shape = 'u8[4096]{0}', space=vmem, size = 0x1000, scoped, tag = 'output window, operand 0, single buffered']
    #allocation3 [shape = 's32[1]{0}', space=sflag, size = 0x4, scoped, tag = 'scoped memory for tpu_custom_call.1']
    %12 = vsyncpa [#allocation3], 0
    // Predicated region
    $region2: #{tpu_custom_call.1} parent=1 // pred_check
      _
    $region3: #{tpu_custom_call.1} parent=1 // pred_check_branch
      %14 = sbr.rel (0) target = $region5
    $region4: #{tpu_custom_call.1} parent=1 // pred_region
      _
    $region5: #{tpu_custom_call.1} parent=1 // pred_fallthru
      _
    // Predicated region
    $region6: #{tpu_custom_call.1} parent=1 // pred_check
      _
    $region7: #{tpu_custom_call.1} parent=1 // pred_check_branch
      %16 = sbr.rel (0) target = $region9
    $region8: #{tpu_custom_call.1} parent=1 // pred_region
      _
    $region9: #{tpu_custom_call.1} parent=1 // pred_fallthru
      _
    // Predicated region
    $region10: #{tpu_custom_call.1} parent=1 // pred_check
      _
    $region11: #{tpu_custom_call.1} parent=1 // pred_check_branch
      %18 = sbr.rel (0) target = $region13
    $region12: #{tpu_custom_call.1} parent=1 // pred_region
      _
    $region13: #{tpu_custom_call.1} parent=1 // pred_fallthru
      _
    // Predicated region
    $region14: #{tpu_custom_call.1} parent=1 // pred_check
      _
    $region15: #{tpu_custom_call.1} parent=1 // pred_check_branch
      %20 = sbr.rel (0) target = $region17
    $region16: #{tpu_custom_call.1} parent=1 // pred_region
      _
    $region17: #{tpu_custom_call.1} parent=1 // pred_fallthru
      _
    // Predicated region
    $region18: #{tpu_custom_call.1} parent=1 // pred_check
      _
    $region19: #{tpu_custom_call.1} parent=1 // pred_check_branch
      %22 = sbr.rel (0) target = $region21
    $region20: #{tpu_custom_call.1} parent=1 // pred_region
      _
    $region21: #{tpu_custom_call.1} parent=1 // pred_fallthru
      _
    // Predicated region
    $region22: #{tpu_custom_call.1} parent=1 // pred_check
      _
    $region23: #{tpu_custom_call.1} parent=1 // pred_check_branch
      %24 = sbr.rel (0) target = $region25
    $region24: #{tpu_custom_call.1} parent=1 // pred_region
      _
    $region25: #{tpu_custom_call.1} parent=1 // pred_fallthru
      _
    // Predicated region
    $region26: #{tpu_custom_call.1} parent=1 // pred_check
      _
    $region27: #{tpu_custom_call.1} parent=1 // pred_check_branch
      %26 = sbr.rel (0) target = $region29
    $region28: #{tpu_custom_call.1} parent=1 // pred_region
      _
    $region29: #{tpu_custom_call.1} parent=1 // pred_fallthru
      _
    %v28 = vld [vmem:[%s0] sm:$0x1]
    %v29 = vld [vmem:[%s0 + $0x1] sm:$0x1]
    %v30 = vld [vmem:[%s0 + $0x2] sm:$0x1]
    %v31 = vld [vmem:[%s0 + $0x3] sm:$0x1]
    %v32 = vld [vmem:[%s1] sm:$0xf]
    %v33 = vld [vmem:[%s2] sm:$0x1]
    %v35 = vlaneseq
    %v36 = vshrl.u32 %v35, 7
    %v37 = vsub.s32 0, %v36
    %v38 = vrot.slane %v33, %v37
    %v44 = vcombine.low %v28, %v29
    %v45 = vcombine.low %v30, %v31
    %v47 = vunpack.c.l.s4 1966171168
    %v48 = vunpack.c.0.s8 %v47
    %v49 = vlaneseq
    %v50 = vshrl.u32 %v49, 7
    %v51 = vsub.s32 %v48, %v50
    %v52 = vrot.slane %v44, %v51
    %v54 = vunpack.c.l.s4 1966171168
    %v55 = vunpack.c.0.s8 %v54
    %v56 = vlaneseq
    %v57 = vshrl.u32 %v56, 7
    %v58 = vsub.s32 %v55, %v57
    %v59 = vrot.slane %v45, %v58
    %v60 = vcombine.low %v52, %v59
    %v62 = vunpack.c.l.s4 1966171168
    %v63 = vunpack.c.0.s8 %v62
    %v64 = vlaneseq
    %v65 = vshrl.u32 %v64, 7
    %v66 = vsub.s32 %v63, %v65
    %v67 = vrot.slane %v60, %v66
    %vm68 = vcmask 64512
    %v70 = vsel %vm68, %v67, 0
    %vm72 = vcmask 1043456
    %v74 = vsel %vm72, %v32, 0
    %76 = vmatprep.subr.bf16.mxu0 0
    %77 = vmatpush1.bf16.msra.mxu0 0
    %78 = vmatprep.subr.bf16.mxu0 0
    %79 = vmatpush1.bf16.msra.mxu0 0
    %80 = vmatprep.subr.bf16.mxu0 0
    %81 = vmatpush1.bf16.msra.mxu0 0
    %82 = vmatprep.subr.bf16.mxu0 0
    %83 = vmatpush1.bf16.msra.mxu0 0
    %84 = vmatprep.subr.bf16.mxu0 0
    %85 = vmatpush1.bf16.msra.mxu0 0
    %86 = vmatprep.subr.bf16.mxu0 0
    %87 = vmatpush1.bf16.msra.mxu0 0
    %88 = vmatprep.subr.bf16.mxu0 0
    %89 = vmatpush1.bf16.msra.mxu0 0
    %90 = vmatprep.subr.bf16.mxu0 0
    %91 = vmatpush1.bf16.msra.mxu0 %v74
    %92 = vmatprep.subr.bf16.mxu0 0
    %93 = vmatpush2.bf16.msra.mxu0 0
    %94 = vmatprep.subr.bf16.mxu0 0
    %95 = vmatpush2.bf16.msra.mxu0 0
    %96 = vmatprep.subr.bf16.mxu0 0
    %97 = vmatpush2.bf16.msra.mxu0 0
    %98 = vmatprep.subr.bf16.mxu0 0
    %99 = vmatpush2.bf16.msra.mxu0 0
    %100 = vmatprep.subr.bf16.mxu0 0
    %101 = vmatpush2.bf16.msra.mxu0 0
    %102 = vmatprep.subr.bf16.mxu0 0
    %103 = vmatpush2.bf16.msra.mxu0 0
    %104 = vmatprep.subr.bf16.mxu0 0
    %105 = vmatpush2.bf16.msra.mxu0 0
    %106 = vmatprep.subr.bf16.mxu0 0
    %107 = vmatpush2.bf16.msra.mxu0 0
    %108 = vmatprep.mubr.bf16.mxu0 0
    %109 = vmatmul.mubr.bf16.gmra.mxu0 %v70
    %v110 = vpop.f32.mrf.mxu0
    %v111 = vadd.f32 %v38, %v110
    %v112 = vpop.f32.mrf.mxu0
    %v113 = vpop.f32.mrf.mxu0
    %v114 = vpop.f32.mrf.mxu0
    %115 = vdwg.mxu0
    %v116 = vmax.f32 %v111, 0.0
    %v117 = vpack.c.bf16 %v116, %v116
    %v118 = vld [vmem:[%s3] sm:$0xf]
    %v119 = vld [vmem:[%s3 + $0x4] sm:$0xf]
    %v120 = vld [vmem:[%s3 + $0x8] sm:$0xf]
    %v121 = vld [vmem:[%s3 + $0xc] sm:$0xf]
    %v122 = vld [vmem:[%s3 + $0x10] sm:$0xf]
    %v123 = vld [vmem:[%s3 + $0x14] sm:$0xf]
    %v124 = vld [vmem:[%s3 + $0x18] sm:$0xf]
    %v125 = vld [vmem:[%s3 + $0x1c] sm:$0xf]
    %v126 = vld [vmem:[%s4] sm:$0x1]
    %v128 = vlaneseq
    %v129 = vshrl.u32 %v128, 7
    %v130 = vsub.s32 0, %v129
    %v131 = vrot.slane %v126, %v130
    %v141 = vunpack.c.l.b16 %v118
    %v142 = vunpack.c.l.b16 %v119
    %v143 = vunpack.c.l.b16 %v120
    %v144 = vunpack.c.l.b16 %v121
    %v145 = vunpack.c.l.b16 %v122
    %v146 = vunpack.c.l.b16 %v123
    %v147 = vunpack.c.l.b16 %v124
    %v148 = vunpack.c.l.b16 %v125
    %v149 = vpack.c.b16 %v142, %v141
    %v150 = vpack.c.b16 %v144, %v143
    %v151 = vpack.c.b16 %v146, %v145
    %v152 = vpack.c.b16 %v148, %v147
    %vm157 = vcmask 523264
    %v159 = vsel %vm157, %v117, 0
    %161 = vmatprep.subr.bf16.mxu0 0
    %162 = vmatpush1.bf16.msra.mxu0 0
    %163 = vmatprep.subr.bf16.mxu0 0
    %164 = vmatpush1.bf16.msra.mxu0 0
    %165 = vmatprep.subr.bf16.mxu0 0
    %166 = vmatpush1.bf16.msra.mxu0 0
    %167 = vmatprep.subr.bf16.mxu0 0
    %168 = vmatpush1.bf16.msra.mxu0 0
    %169 = vmatprep.subr.bf16.mxu0 0
    %170 = vmatpush1.bf16.msra.mxu0 %v152
    %171 = vmatprep.subr.bf16.mxu0 0
    %172 = vmatpush1.bf16.msra.mxu0 %v151
    %173 = vmatprep.subr.bf16.mxu0 0
    %174 = vmatpush1.bf16.msra.mxu0 %v150
    %175 = vmatprep.subr.bf16.mxu0 0
    %176 = vmatpush1.bf16.msra.mxu0 %v149
    %177 = vmatprep.subr.bf16.mxu0 0
    %178 = vmatpush2.bf16.msra.mxu0 0
    %179 = vmatprep.subr.bf16.mxu0 0
    %180 = vmatpush2.bf16.msra.mxu0 0
    %181 = vmatprep.subr.bf16.mxu0 0
    %182 = vmatpush2.bf16.msra.mxu0 0
    %183 = vmatprep.subr.bf16.mxu0 0
    %184 = vmatpush2.bf16.msra.mxu0 0
    %185 = vmatprep.subr.bf16.mxu0 0
    %186 = vmatpush2.bf16.msra.mxu0 0
    %187 = vmatprep.subr.bf16.mxu0 0
    %188 = vmatpush2.bf16.msra.mxu0 0
    %189 = vmatprep.subr.bf16.mxu0 0
    %190 = vmatpush2.bf16.msra.mxu0 0
    %191 = vmatprep.subr.bf16.mxu0 0
    %192 = vmatpush2.bf16.msra.mxu0 0
    %193 = vmatprep.mubr.bf16.mxu0 0
    %194 = vmatmul.mubr.bf16.gmra.mxu0 %v159
    %v195 = vpop.f32.mrf.mxu0
    %v196 = vadd.f32 %v131, %v195
    %v197 = vpop.f32.mrf.mxu0
    %v198 = vpop.f32.mrf.mxu0
    %v199 = vpop.f32.mrf.mxu0
    %200 = vdwg.mxu0
    %v201 = vmax.f32 %v196, 0.0
    %v202 = vpack.c.bf16 %v201, %v201
    %v203 = vld [vmem:[%s5] sm:$0xf]
    %v204 = vld [vmem:[%s5 + $0x4] sm:$0xf]
    %v205 = vld [vmem:[%s5 + $0x8] sm:$0xf]
    %v206 = vld [vmem:[%s5 + $0xc] sm:$0xf]
    %v207 = vld [vmem:[%s5 + $0x10] sm:$0xf]
    %v208 = vld [vmem:[%s5 + $0x14] sm:$0xf]
    %v209 = vld [vmem:[%s5 + $0x18] sm:$0xf]
    %v210 = vld [vmem:[%s5 + $0x1c] sm:$0xf]
    %v211 = vld [vmem:[%s6] sm:$0x1]
    %v213 = vlaneseq
    %v214 = vshrl.u32 %v213, 7
    %v215 = vsub.s32 0, %v214
    %v216 = vrot.slane %v211, %v215
    %v226 = vunpack.c.l.b16 %v203
    %v227 = vunpack.c.l.b16 %v204
    %v228 = vunpack.c.l.b16 %v205
    %v229 = vunpack.c.l.b16 %v206
    %v230 = vunpack.c.l.b16 %v207
    %v231 = vunpack.c.l.b16 %v208
    %v232 = vunpack.c.l.b16 %v209
    %v233 = vunpack.c.l.b16 %v210
    %v234 = vpack.c.b16 %v227, %v226
    %v235 = vpack.c.b16 %v229, %v228
    %v236 = vpack.c.b16 %v231, %v230
    %v237 = vpack.c.b16 %v233, %v232
    %v243 = vsel %vm157, %v202, 0
    %245 = vmatprep.subr.bf16.mxu0 0
    %246 = vmatpush1.bf16.msra.mxu0 0
    %247 = vmatprep.subr.bf16.mxu0 0
    %248 = vmatpush1.bf16.msra.mxu0 0
    %249 = vmatprep.subr.bf16.mxu0 0
    %250 = vmatpush1.bf16.msra.mxu0 0
    %251 = vmatprep.subr.bf16.mxu0 0
    %252 = vmatpush1.bf16.msra.mxu0 0
    %253 = vmatprep.subr.bf16.mxu0 0
    %254 = vmatpush1.bf16.msra.mxu0 %v237
    %255 = vmatprep.subr.bf16.mxu0 0
    %256 = vmatpush1.bf16.msra.mxu0 %v236
    %257 = vmatprep.subr.bf16.mxu0 0
    %258 = vmatpush1.bf16.msra.mxu0 %v235
    %259 = vmatprep.subr.bf16.mxu0 0
    %260 = vmatpush1.bf16.msra.mxu0 %v234
    %261 = vmatprep.subr.bf16.mxu0 0
    %262 = vmatpush2.bf16.msra.mxu0 0
    %263 = vmatprep.subr.bf16.mxu0 0
    %264 = vmatpush2.bf16.msra.mxu0 0
    %265 = vmatprep.subr.bf16.mxu0 0
    %266 = vmatpush2.bf16.msra.mxu0 0
    %267 = vmatprep.subr.bf16.mxu0 0
    %268 = vmatpush2.bf16.msra.mxu0 0
    %269 = vmatprep.subr.bf16.mxu0 0
    %270 = vmatpush2.bf16.msra.mxu0 0
    %271 = vmatprep.subr.bf16.mxu0 0
    %272 = vmatpush2.bf16.msra.mxu0 0
    %273 = vmatprep.subr.bf16.mxu0 0
    %274 = vmatpush2.bf16.msra.mxu0 0
    %275 = vmatprep.subr.bf16.mxu0 0
    %276 = vmatpush2.bf16.msra.mxu0 0
    %277 = vmatprep.mubr.bf16.mxu0 0
    %278 = vmatmul.mubr.bf16.gmra.mxu0 %v243
    %v279 = vpop.f32.mrf.mxu0
    %v280 = vadd.f32 %v216, %v279
    %v281 = vpop.f32.mrf.mxu0
    %v282 = vpop.f32.mrf.mxu0
    %v283 = vpop.f32.mrf.mxu0
    %284 = vdwg.mxu0
    %vm285 = vcmask 31744
    %286 = vst.msk [vmem:[#allocation2] sm:$0xff] %vm285, %v280
    // Predicated region
    $region30: #{tpu_custom_call.1} parent=1 // pred_check
      _
    $region31: #{tpu_custom_call.1} parent=1 // pred_check_branch
      %288 = sbr.rel (0) target = $region33
    $region32: #{tpu_custom_call.1} parent=1 // pred_region
      %s290 = ssub.s32 128, 32
      %291 = vsyncadd [#allocation3], %s290
      %s292 = sshll.u32 [#allocation2], 4
      %s293 = int_to_ptr.vmem [resolvable:$true] %s292
      %298 = dma.vmem_to_hbm [thread:$0]  %s293, 32, %s7, [#allocation3], 32, 32, 2
    $region33: #{tpu_custom_call.1} parent=1 // pred_fallthru
      _
    // Predicated region
    $region34: #{tpu_custom_call.1} parent=1 // pred_check
      _
    $region35: #{tpu_custom_call.1} parent=1 // pred_check_branch
      %300 = sbr.rel (0) target = $region37
    $region36: #{tpu_custom_call.1} parent=1 // pred_region
      %301 = dma.done [#allocation3], 128
    $region37: #{tpu_custom_call.1} parent=1 // pred_fallthru
      _
    %302 = vsyncpa [#allocation3], 1

</llo_original>
